<compile_context>
chip_gen: v6e
topology: v6e:2x2x1
jax: 0.10.0
libtpu: 0.0.40
codegen_flags: <defaults>
</compile_context>

<pallas_src>
import jax
import jax.numpy as jnp
from jax.experimental import pallas as pl
from jax.experimental.pallas import tpu as pltpu


def _round_up(x, m):
    return ((x + m - 1) // m) * m


def _leaky_relu(x, slope=0.2):
    return jnp.where(x > 0, x, slope * x)


def discriminator_kernel(x_ref, w1_ref, b1_ref, w2_ref, b2_ref, w3_ref, b3_ref, o_ref):
    # Layer 1: Linear(input_dim, 512) + LeakyReLU(0.2).
    # x arrives f32; the bf16 cast runs on the VPU (free relative to MXU/DMA).
    x = x_ref[...].astype(jnp.bfloat16)
    h1 = jnp.dot(x, w1_ref[...], preferred_element_type=jnp.float32)
    h1 = _leaky_relu(h1 + b1_ref[...])

    # Layer 2: Linear(512, 256) + LeakyReLU(0.2).
    h2 = jnp.dot(h1.astype(jnp.bfloat16), w2_ref[...], preferred_element_type=jnp.float32)
    h2 = _leaky_relu(h2 + b2_ref[...])

    # Layer 3: Linear(256, 1) + Sigmoid on VPU (broadcast mul) + XLU (lane reduce);
    # b3 is a scalar read from SMEM.
    h3 = jnp.sum(h2 * w3_ref[...], axis=-1, keepdims=True) + b3_ref[0, 0]   # [tm, 1]
    # Lane-dense store: transpose to [1, tm] (one XLU op) so the output DMA is
    # dense along lanes instead of a masked last-dim-1 partial store.
    o_ref[...] = jnp.transpose(jax.nn.sigmoid(h3))


def _resident_spec(block_shape, index_map):
    """Grid-invariant operand: constant index_map; single-buffered when supported."""
    if hasattr(pl, "Buffered"):
        try:
            return pl.BlockSpec(block_shape, index_map, pipeline_mode=pl.Buffered(1))
        except TypeError:
            pass
    return pl.BlockSpec(block_shape, index_map)


def _choose_batch_tile(B, max_tile=1024):
    """Pick (tm, num_tiles).

    Small B: a single tile (tm == padded B, multiple of 8; full-dim output block
    is legal). Larger B: tm is a multiple of 128 (lane-dense output constraint),
    tm <= max_tile, with >= 2 grid steps (feeds both v7x TensorCores) and minimal
    batch zero-padding.
    """
    B8 = _round_up(B, 8)
    if B8 <= 256:
        return B8, 1
    best = None
    for t in range(128, max_tile + 1, 128):
        n = pl.cdiv(B8, t)
        if n < 2:
            continue
        pad_total = n * t
        if best is None or pad_total < best[0] or (pad_total == best[0] and t > best[1]):
            best = (pad_total, t, n)
    _, tm, n = best
    return tm, n


def _vmem_limit_bytes(tm, D, H1, H2):
    f32, bf16 = 4, 2
    est = (
        2 * tm * D * f32                      # double-buffered x tiles
        + 2 * tm * f32                        # double-buffered output rows
        + 2 * (D * H1 + H1 * H2) * bf16       # weights (x2 in case single-buffering unavailable)
        + 2 * (H1 + 2 * H2) * f32             # biases + w3 row
        + tm * (H1 + H2) * f32                # h1 / h2 intermediates
        + tm * (D + H1) * bf16                # in-kernel bf16 casts of x / h1
    )
    return int(min(64 * 1024 * 1024, max(32 * 1024 * 1024, 2 * est)))


def prepare_params(params):
    """One-time conversion of f32 params into the kernel layout (hoisted out of
    the per-call path): bf16 matmul weights, f32 bias rows, (1, H2) w3 row, and
    a (1, 1) SMEM scalar for b3."""
    w1, b1, w2, b2, w3, b3 = params
    return (
        w1.astype(jnp.bfloat16),
        b1.reshape(1, -1).astype(jnp.float32),
        w2.astype(jnp.bfloat16),
        b2.reshape(1, -1).astype(jnp.float32),
        w3.reshape(1, -1).astype(jnp.float32),
        b3.reshape(1, 1).astype(jnp.float32),
    )


def discriminator_forward(x, prepared_params, *, max_batch_tile=1024):
    """x: [B, input_dim] float32. prepared_params from prepare_params(). Returns [B, 1] f32."""
    w1, b1, w2, b2, w3, b3 = prepared_params
    B, D = x.shape
    H1 = w1.shape[1]
    H2 = w2.shape[1]
    assert w1.shape[0] == D and w2.shape[0] == H1 and w3.shape == (1, H2)

    tm, ntiles = _choose_batch_tile(B, max_batch_tile)
    B_pad = tm * ntiles
    x_p = x if B_pad == B else jnp.pad(x, ((0, B_pad - B), (0, 0)))

    const = lambda i: (0, 0)
    out = pl.pallas_call(
        discriminator_kernel,
        out_shape=jax.ShapeDtypeStruct((1, B_pad), jnp.float32),
        grid_spec=pltpu.PrefetchScalarGridSpec(
            num_scalar_prefetch=0,
            grid=(ntiles,),
            in_specs=[
                pl.BlockSpec((tm, D), lambda i: (i, 0)),            # x tile (f32)
                _resident_spec((D, H1), const),                     # W1 (bf16)
                _resident_spec((1, H1), const),                     # b1 (f32)
                _resident_spec((H1, H2), const),                    # W2 (bf16)
                _resident_spec((1, H2), const),                     # b2 (f32)
                _resident_spec((1, H2), const),                     # w3 row (f32)
                pl.BlockSpec(memory_space=pltpu.MemorySpace.SMEM),  # b3 scalar
            ],
            out_specs=pl.BlockSpec((1, tm), lambda i: (0, i)),      # lane-dense output rows
        ),
        compiler_params=pltpu.CompilerParams(
            dimension_semantics=("parallel",),
            vmem_limit_bytes=_vmem_limit_bytes(tm, D, H1, H2),
        ),
    )(x_p, w1, b1, w2, b2, w3, b3)

    return out[0, :B][:, None]


def init_params(key, input_dim):
    """Deterministic init mimicking nn.Linear's U(-1/sqrt(fan_in), 1/sqrt(fan_in))."""
    ks = jax.random.split(key, 6)

    def linear(kw, kb, fan_in, fan_out):
        bound = 1.0 / jnp.sqrt(fan_in)
        w = jax.random.uniform(kw, (fan_in, fan_out), jnp.float32, -bound, bound)
        b = jax.random.uniform(kb, (1, fan_out), jnp.float32, -bound, bound)
        return w, b

    w1, b1 = linear(ks[0], ks[1], input_dim, 512)
    w2, b2 = linear(ks[2], ks[3], 512, 256)
    w3, b3 = linear(ks[4], ks[5], 256, 1)
    return (w1, b1, w2, b2, w3, b3)


def reference_forward(x, params):
    """Mirrors the kernel's precision choices (bf16 matmul operands, f32 accumulation)."""
    w1, b1, w2, b2, w3, b3 = params
    h = jnp.dot(x.astype(jnp.bfloat16), w1.astype(jnp.bfloat16),
                preferred_element_type=jnp.float32)
    h = _leaky_relu(h + b1)
    h = jnp.dot(h.astype(jnp.bfloat16), w2.astype(jnp.bfloat16),
                preferred_element_type=jnp.float32)
    h = _leaky_relu(h + b2)
    return jax.nn.sigmoid(h @ w3 + b3)


if __name__ == "__main__":
    key = jax.random.PRNGKey(0)
    k_params, k_x1, k_x2 = jax.random.split(key, 3)

    input_dim = 32
    params = init_params(k_params, input_dim)
    prepared = prepare_params(params)  # one-time weight prep, reused across calls

    # Small batch: single-tile path.
    x_small = jax.random.normal(k_x1, (8, input_dim), jnp.float32)
    out_small = jax.block_until_ready(discriminator_forward(x_small, prepared))
    ref_small = reference_forward(x_small, params)
    assert out_small.shape == (8, 1)
    assert jnp.allclose(out_small, ref_small, atol=2e-3, rtol=2e-3), "small-batch mismatch"

    # Larger batch: multi-tile path (lane-dense multi-step output, batch padding).
    x_big = jax.random.normal(k_x2, (300, input_dim), jnp.float32)
    out_big = jax.block_until_ready(discriminator_forward(x_big, prepared))
    ref_big = reference_forward(x_big, params)
    assert out_big.shape == (300, 1)
    assert jnp.allclose(out_big, ref_big, atol=2e-3, rtol=2e-3), "large-batch mismatch"

    print("KERNEL_OK")
</pallas_src>

<mosaic_0001>
module attributes {stable_mosaic.version = 11 : i64} {
  func.func @discriminator_kernel(%arg0: i32, %arg1: memref<8x32xf32, #tpu.memory_space<vmem>>, %arg2: memref<32x512xbf16, #tpu.memory_space<vmem>>, %arg3: memref<1x512xf32, #tpu.memory_space<vmem>>, %arg4: memref<512x256xbf16, #tpu.memory_space<vmem>>, %arg5: memref<1x256xf32, #tpu.memory_space<vmem>>, %arg6: memref<1x256xf32, #tpu.memory_space<vmem>>, %arg7: memref<1x1xf32, #tpu.memory_space<smem>>, %arg8: memref<1x8xf32, #tpu.memory_space<vmem>>) attributes {dimension_semantics = [#tpu.dimension_semantics<parallel>], iteration_bounds = array<i64: 1>, scalar_prefetch = 0 : i64, scratch_operands = 0 : i64, tpu.core_type = #tpu.core_type<tc>, window_params = [{transform_indices = @transform_0, window_bounds = array<i64: 8, 32>}, {pipeline_mode = #tpu.pipeline_mode<synchronous>, transform_indices = @transform_1, window_bounds = array<i64: 32, 512>}, {pipeline_mode = #tpu.pipeline_mode<synchronous>, transform_indices = @transform_2, window_bounds = array<i64: 1, 512>}, {pipeline_mode = #tpu.pipeline_mode<synchronous>, transform_indices = @transform_3, window_bounds = array<i64: 512, 256>}, {pipeline_mode = #tpu.pipeline_mode<synchronous>, transform_indices = @transform_4, window_bounds = array<i64: 1, 256>}, {pipeline_mode = #tpu.pipeline_mode<synchronous>, transform_indices = @transform_5, window_bounds = array<i64: 1, 256>}, {transform_indices = @transform_6, window_bounds = array<i64: 1, 1>}, {transform_indices = @transform_7, window_bounds = array<i64: 1, 8>}]} {
    %c0 = arith.constant 0 : index
    %c0_0 = arith.constant 0 : index
    %0 = vector.load %arg1[%c0, %c0_0] : memref<8x32xf32, #tpu.memory_space<vmem>>, vector<8x32xf32>
    %1 = arith.truncf %0 : vector<8x32xf32> to vector<8x32xbf16>
    %c0_1 = arith.constant 0 : index
    %c0_2 = arith.constant 0 : index
    %2 = vector.load %arg2[%c0_1, %c0_2] : memref<32x512xbf16, #tpu.memory_space<vmem>>, vector<32x512xbf16>
    %cst = arith.constant dense<0.000000e+00> : vector<8x512xf32>
    %3 = tpu.matmul %1, %2, %cst {dimension_numbers = #tpu.dot_dimension_numbers<[1], [0], [0], [1], [0, 0, 1, 1], [], []>} : vector<8x32xbf16>, vector<32x512xbf16>, vector<8x512xf32> -> vector<8x512xf32>
    %c0_3 = arith.constant 0 : index
    %c0_4 = arith.constant 0 : index
    %4 = vector.load %arg3[%c0_3, %c0_4] : memref<1x512xf32, #tpu.memory_space<vmem>>, vector<1x512xf32>
    %5 = vector.broadcast %4 : vector<1x512xf32> to vector<8x512xf32>
    %6 = arith.addf %3, %5 : vector<8x512xf32>
    %cst_5 = arith.constant 0.000000e+00 : f32
    %7 = vector.broadcast %cst_5 : f32 to vector<8x512xf32>
    %8 = arith.cmpf ogt, %6, %7 : vector<8x512xf32>
    %cst_6 = arith.constant 2.000000e-01 : f32
    %9 = vector.broadcast %cst_6 : f32 to vector<8x512xf32>
    %10 = arith.mulf %9, %6 : vector<8x512xf32>
    %11 = arith.select %8, %6, %10 : vector<8x512xi1>, vector<8x512xf32>
    %12 = arith.truncf %11 : vector<8x512xf32> to vector<8x512xbf16>
    %c0_7 = arith.constant 0 : index
    %c0_8 = arith.constant 0 : index
    %13 = vector.load %arg4[%c0_7, %c0_8] : memref<512x256xbf16, #tpu.memory_space<vmem>>, vector<512x256xbf16>
    %cst_9 = arith.constant dense<0.000000e+00> : vector<8x256xf32>
    %14 = tpu.matmul %12, %13, %cst_9 {dimension_numbers = #tpu.dot_dimension_numbers<[1], [0], [0], [1], [0, 0, 1, 1], [], []>} : vector<8x512xbf16>, vector<512x256xbf16>, vector<8x256xf32> -> vector<8x256xf32>
    %c0_10 = arith.constant 0 : index
    %c0_11 = arith.constant 0 : index
    %15 = vector.load %arg5[%c0_10, %c0_11] : memref<1x256xf32, #tpu.memory_space<vmem>>, vector<1x256xf32>
    %16 = vector.broadcast %15 : vector<1x256xf32> to vector<8x256xf32>
    %17 = arith.addf %14, %16 : vector<8x256xf32>
    %cst_12 = arith.constant 0.000000e+00 : f32
    %18 = vector.broadcast %cst_12 : f32 to vector<8x256xf32>
    %19 = arith.cmpf ogt, %17, %18 : vector<8x256xf32>
    %cst_13 = arith.constant 2.000000e-01 : f32
    %20 = vector.broadcast %cst_13 : f32 to vector<8x256xf32>
    %21 = arith.mulf %20, %17 : vector<8x256xf32>
    %22 = arith.select %19, %17, %21 : vector<8x256xi1>, vector<8x256xf32>
    %c0_14 = arith.constant 0 : index
    %c0_15 = arith.constant 0 : index
    %23 = vector.load %arg6[%c0_14, %c0_15] : memref<1x256xf32, #tpu.memory_space<vmem>>, vector<1x256xf32>
    %24 = vector.broadcast %23 : vector<1x256xf32> to vector<8x256xf32>
    %25 = arith.mulf %22, %24 : vector<8x256xf32>
    %cst_16 = arith.constant dense<0.000000e+00> : vector<8xf32>
    %26 = vector.multi_reduction <add>, %25, %cst_16 [1] : vector<8x256xf32> to vector<8xf32>
    %27 = vector.shape_cast %26 : vector<8xf32> to vector<8x1xf32>
    %c0_17 = arith.constant 0 : index
    %c0_18 = arith.constant 0 : index
    %28 = memref.load %arg7[%c0_17, %c0_18] : memref<1x1xf32, #tpu.memory_space<smem>>
    %29 = vector.broadcast %28 : f32 to vector<8x1xf32>
    %30 = arith.addf %27, %29 : vector<8x1xf32>
    %31 = arith.negf %30 : vector<8x1xf32>
    %32 = math.exp %31 : vector<8x1xf32>
    %cst_19 = arith.constant 1.000000e+00 : f32
    %33 = vector.broadcast %cst_19 : f32 to vector<8x1xf32>
    %34 = arith.addf %33, %32 : vector<8x1xf32>
    %35 = arith.divf %33, %34 : vector<8x1xf32>
    %36 = tpu.transpose %35, [1, 0] : vector<8x1xf32> -> vector<1x8xf32>
    %c0_20 = arith.constant 0 : index
    %c0_21 = arith.constant 0 : index
    %37 = vector.load %arg8[%c0_20, %c0_21] : memref<1x8xf32, #tpu.memory_space<vmem>>, vector<1x8xf32>
    tpu.vector_store %arg8[%c0_20, %c0_21], %36 {strides = array<i32>} : memref<1x8xf32, #tpu.memory_space<vmem>>, vector<1x8xf32>,
    return
  }
  func.func @transform_0(%arg0: i32) -> (i32, i32) {
    %c0_i32 = arith.constant 0 : i32
    %c0_i32_0 = arith.constant 0 : i32
    return %arg0, %c0_i32 : i32, i32
  }
  func.func @transform_1(%arg0: i32) -> (i32, i32) {
    %c0_i32 = arith.constant 0 : i32
    %c0_i32_0 = arith.constant 0 : i32
    %c0_i32_1 = arith.constant 0 : i32
    return %c0_i32, %c0_i32_0 : i32, i32
  }
  func.func @transform_2(%arg0: i32) -> (i32, i32) {
    %c0_i32 = arith.constant 0 : i32
    %c0_i32_0 = arith.constant 0 : i32
    %c0_i32_1 = arith.constant 0 : i32
    return %c0_i32, %c0_i32_0 : i32, i32
  }
  func.func @transform_3(%arg0: i32) -> (i32, i32) {
    %c0_i32 = arith.constant 0 : i32
    %c0_i32_0 = arith.constant 0 : i32
    %c0_i32_1 = arith.constant 0 : i32
    return %c0_i32, %c0_i32_0 : i32, i32
  }
  func.func @transform_4(%arg0: i32) -> (i32, i32) {
    %c0_i32 = arith.constant 0 : i32
    %c0_i32_0 = arith.constant 0 : i32
    %c0_i32_1 = arith.constant 0 : i32
    return %c0_i32, %c0_i32_0 : i32, i32
  }
  func.func @transform_5(%arg0: i32) -> (i32, i32) {
    %c0_i32 = arith.constant 0 : i32
    %c0_i32_0 = arith.constant 0 : i32
    %c0_i32_1 = arith.constant 0 : i32
    return %c0_i32, %c0_i32_0 : i32, i32
  }
  func.func @transform_6(%arg0: i32) -> (i32, i32) {
    %c0_i32 = arith.constant 0 : i32
    %c0_i32_0 = arith.constant 0 : i32
    %c0_i32_1 = arith.constant 0 : i32
    return %c0_i32, %c0_i32_0 : i32, i32
  }
  func.func @transform_7(%arg0: i32) -> (i32, i32) {
    %c0_i32 = arith.constant 0 : i32
    %c0_i32_0 = arith.constant 0 : i32
    return %c0_i32, %arg0 : i32, i32
  }
}

</mosaic_0001>

<llo_original>
// kernel: tpu_custom_call.1
$region0: #{tpu_custom_call.1}
  #allocation0 [shape = 'u32[]', space=smem, size = 0x4, offset = 0x4, fixed_abs, tag = 'smem constant byte address 0x4 - core index']
  #allocation1 [shape = 'u32[144,128]{1,0:T(1,128)}', space=vmem, size = 0x12000, scoped, tag = 'internal scratch']
  #allocation2 [shape = 'f32[1,1]{1,0:T(1,128)S(6)}', space=smem, size = 0x200, scoped, tag = 'scoped memory for tpu_custom_call.1']
  %s0 = inlined_call_operand.hbm [shape: f32[8,32], index: 0, kind: input, shape index: {}]
  %s1 = inlined_call_operand.hbm [shape: bf16[32,512], index: 1, kind: input, shape index: {}]
  %s2 = inlined_call_operand.vmem [shape: f32[1,512], index: 2, kind: input, shape index: {}]
  %s3 = inlined_call_operand.hbm [shape: bf16[512,256], index: 3, kind: input, shape index: {}]
  %s4 = inlined_call_operand.vmem [shape: f32[1,256], index: 4, kind: input, shape index: {}]
  %s5 = inlined_call_operand.vmem [shape: f32[1,256], index: 5, kind: input, shape index: {}]
  %s6 = inlined_call_operand.<no memory space> [shape: f32[1,1], index: 6, kind: input, shape index: {}]
  %s7 = inlined_call_operand.hbm [shape: f32[1,8], index: 7, kind: output, shape index: {}]
  %s8 = sld [smem:[#allocation0]]
  $region50: #{tpu_custom_call.1} parent=0
    _
  %s10 = ssub.s32 1, %s8
  %s11 = scalar_select 0, %s10, %s8
  %12 = sst [smem:[#allocation2]] %s6
  $region1: #{tpu_custom_call.1} parent=0
    #allocation3 [shape = 'u8[4096]{0}', space=vmem, size = 0x1000, scoped, tag = 'input window, operand 0, single buffered']
    #allocation4 [shape = 's32[1]{0}', space=sflag, size = 0x4, scoped, tag = 'scoped memory for tpu_custom_call.1']
    #allocation5 [shape = 's32[1]{0}', space=sflag, size = 0x4, scoped, tag = 'scoped memory for tpu_custom_call.1']
    #allocation6 [shape = 'u8[32768]{0}', space=vmem, size = 0x8000, scoped, tag = 'input window, operand 1, single buffered']
    #allocation7 [shape = 's32[1]{0}', space=sflag, size = 0x4, scoped, tag = 'scoped memory for tpu_custom_call.1']
    #allocation8 [shape = 'u8[262144]{0}', space=vmem, size = 0x40000, scoped, tag = 'input window, operand 3, single buffered']
    #allocation9 [shape = 'u8[512]{0}', space=vmem, size = 0x400, scoped, tag = 'output window, operand 0, single buffered']
    %13 = vsyncpa [#allocation4], 0
    %14 = vsyncpa [#allocation7], 0
    %15 = vsyncpa [#allocation5], 0
    // Predicated region
    $region2: #{tpu_custom_call.1} parent=1 // pred_check
      _
    $region3: #{tpu_custom_call.1} parent=1 // pred_check_branch
      %17 = sbr.rel (0) target = $region5
    $region4: #{tpu_custom_call.1} parent=1 // pred_region
      %s19 = ssub.s32 128, 128
      %20 = vsyncadd [#allocation4], %s19
      %s22 = sshll.u32 [#allocation3], 4
      %s23 = int_to_ptr.vmem [resolvable:$true] %s22
      %25 = dma.hbm_to_vmem [thread:$0]  %s0, 128, %s23, [#allocation4]
    $region5: #{tpu_custom_call.1} parent=1 // pred_fallthru
      _
    // Predicated region
    $region6: #{tpu_custom_call.1} parent=1 // pred_check
      _
    $region7: #{tpu_custom_call.1} parent=1 // pred_check_branch
      %27 = sbr.rel (0) target = $region9
    $region8: #{tpu_custom_call.1} parent=1 // pred_region
      %s29 = ssub.s32 1024, 1024
      %30 = vsyncadd [#allocation7], %s29
      %s31 = sshll.u32 [#allocation6], 4
      %s32 = int_to_ptr.vmem [resolvable:$true] %s31
      %37 = dma.hbm_to_vmem [thread:$0]  %s1, 1024, %s32, [#allocation7], 256, 256, 16
    $region9: #{tpu_custom_call.1} parent=1 // pred_fallthru
      _
    // Predicated region
    $region10: #{tpu_custom_call.1} parent=1 // pred_check
      _
    $region11: #{tpu_custom_call.1} parent=1 // pred_check_branch
      %39 = sbr.rel (0) target = $region13
    $region12: #{tpu_custom_call.1} parent=1 // pred_region
      _
    $region13: #{tpu_custom_call.1} parent=1 // pred_fallthru
      _
    // Predicated region
    $region14: #{tpu_custom_call.1} parent=1 // pred_check
      _
    $region15: #{tpu_custom_call.1} parent=1 // pred_check_branch
      %41 = sbr.rel (0) target = $region17
    $region16: #{tpu_custom_call.1} parent=1 // pred_region
      %s43 = ssub.s32 8192, 8192
      %44 = vsyncadd [#allocation7], %s43
      %s45 = sshll.u32 [#allocation8], 4
      %s46 = int_to_ptr.vmem [resolvable:$true] %s45
      %51 = dma.hbm_to_vmem [thread:$0]  %s3, 8192, %s46, [#allocation7], 128, 128, 8
    $region17: #{tpu_custom_call.1} parent=1 // pred_fallthru
      _
    // Predicated region
    $region18: #{tpu_custom_call.1} parent=1 // pred_check
      _
    $region19: #{tpu_custom_call.1} parent=1 // pred_check_branch
      %53 = sbr.rel (0) target = $region21
    $region20: #{tpu_custom_call.1} parent=1 // pred_region
      _
    $region21: #{tpu_custom_call.1} parent=1 // pred_fallthru
      _
    // Predicated region
    $region22: #{tpu_custom_call.1} parent=1 // pred_check
      _
    $region23: #{tpu_custom_call.1} parent=1 // pred_check_branch
      %55 = sbr.rel (0) target = $region25
    $region24: #{tpu_custom_call.1} parent=1 // pred_region
      _
    $region25: #{tpu_custom_call.1} parent=1 // pred_fallthru
      _
    // Predicated region
    $region26: #{tpu_custom_call.1} parent=1 // pred_check
      _
    $region27: #{tpu_custom_call.1} parent=1 // pred_check_branch
      %57 = sbr.rel (0) target = $region29
    $region28: #{tpu_custom_call.1} parent=1 // pred_region
      _
    $region29: #{tpu_custom_call.1} parent=1 // pred_fallthru
      _
    // Predicated region
    $region30: #{tpu_custom_call.1} parent=1 // pred_check
      _
    $region31: #{tpu_custom_call.1} parent=1 // pred_check_branch
      %59 = sbr.rel (0) target = $region33
    $region32: #{tpu_custom_call.1} parent=1 // pred_region
      %60 = dma.done [#allocation4], 128
    $region33: #{tpu_custom_call.1} parent=1 // pred_fallthru
      _
    // Predicated region
    $region34: #{tpu_custom_call.1} parent=1 // pred_check
      _
    $region35: #{tpu_custom_call.1} parent=1 // pred_check_branch
      %62 = sbr.rel (0) target = $region37
    $region36: #{tpu_custom_call.1} parent=1 // pred_region
      %63 = dma.done [#allocation7], 1024
    $region37: #{tpu_custom_call.1} parent=1 // pred_fallthru
      _
    // Predicated region
    $region38: #{tpu_custom_call.1} parent=1 // pred_check
      _
    $region39: #{tpu_custom_call.1} parent=1 // pred_check_branch
      %65 = sbr.rel (0) target = $region41
    $region40: #{tpu_custom_call.1} parent=1 // pred_region
      %66 = dma.done [#allocation7], 8192
    $region41: #{tpu_custom_call.1} parent=1 // pred_fallthru
      _
    %v68 = vld [vmem:[#allocation3] sm:$0xff]
    %v69 = vpack.c.bf16 %v68, %v68
    %v70 = vld [vmem:[#allocation6] sm:$0xff]
    %v71 = vld [vmem:[#allocation6 + $0x8] sm:$0xff]
    %v72 = vld [vmem:[#allocation6 + $0x10] sm:$0xff]
    %v73 = vld [vmem:[#allocation6 + $0x18] sm:$0xff]
    %v74 = vld [vmem:[#allocation6 + $0x20] sm:$0xff]
    %v75 = vld [vmem:[#allocation6 + $0x28] sm:$0xff]
    %v76 = vld [vmem:[#allocation6 + $0x30] sm:$0xff]
    %v77 = vld [vmem:[#allocation6 + $0x38] sm:$0xff]
    %v78 = vld [vmem:[%s2] sm:$0xf]
    %v80 = vlaneseq
    %v81 = vshrl.u32 %v80, 7
    %v82 = vsub.s32 0, %v81
    %v83 = vrot.slane %v78, %v82
    %v84 = vlaneseq
    %v85 = vshrl.u32 %v84, 7
    %v86 = vsub.s32 1, %v85
    %v87 = vrot.slane %v78, %v86
    %v88 = vlaneseq
    %v89 = vshrl.u32 %v88, 7
    %v90 = vsub.s32 2, %v89
    %v91 = vrot.slane %v78, %v90
    %v92 = vlaneseq
    %v93 = vshrl.u32 %v92, 7
    %v94 = vsub.s32 3, %v93
    %v95 = vrot.slane %v78, %v94
    %v108 = vunpack.c.l.b16 %v70
    %v109 = vunpack.c.h.b16 %v70
    %v110 = vunpack.c.l.b16 %v71
    %v111 = vunpack.c.h.b16 %v71
    %v112 = vunpack.c.l.b16 %v72
    %v113 = vunpack.c.h.b16 %v72
    %v114 = vunpack.c.l.b16 %v73
    %v115 = vunpack.c.h.b16 %v73
    %v116 = vunpack.c.l.b16 %v74
    %v117 = vunpack.c.h.b16 %v74
    %v118 = vunpack.c.l.b16 %v75
    %v119 = vunpack.c.h.b16 %v75
    %v120 = vunpack.c.l.b16 %v76
    %v121 = vunpack.c.h.b16 %v76
    %v122 = vunpack.c.l.b16 %v77
    %v123 = vunpack.c.h.b16 %v77
    %v124 = vpack.c.b16 %v112, %v108
    %v125 = vpack.c.b16 %v113, %v109
    %v126 = vpack.c.b16 %v114, %v110
    %v127 = vpack.c.b16 %v115, %v111
    %v128 = vpack.c.b16 %v120, %v116
    %v129 = vpack.c.b16 %v121, %v117
    %v130 = vpack.c.b16 %v122, %v118
    %v131 = vpack.c.b16 %v123, %v119
    %vm140 = vcmask 261120
    %v142 = vsel %vm140, %v69, 0
    %144 = vmatprep.subr.bf16.mxu0 0
    %145 = vmatpush1.bf16.msra.mxu0 0
    %146 = vmatprep.subr.bf16.mxu0 0
    %147 = vmatpush1.bf16.msra.mxu0 0
    %148 = vmatprep.subr.bf16.mxu0 0
    %149 = vmatpush1.bf16.msra.mxu0 0
    %150 = vmatprep.subr.bf16.mxu0 0
    %151 = vmatpush1.bf16.msra.mxu0 0
    %152 = vmatprep.subr.bf16.mxu0 0
    %153 = vmatpush1.bf16.msra.mxu0 0
    %154 = vmatprep.subr.bf16.mxu0 0
    %155 = vmatpush1.bf16.msra.mxu0 0
    %156 = vmatprep.subr.bf16.mxu0 %v129
    %157 = vmatpush1.bf16.msra.mxu0 %v128
    %158 = vmatprep.subr.bf16.mxu0 %v125
    %159 = vmatpush1.bf16.msra.mxu0 %v124
    %160 = vmatprep.subr.bf16.mxu0 0
    %161 = vmatpush2.bf16.msra.mxu0 0
    %162 = vmatprep.subr.bf16.mxu0 0
    %163 = vmatpush2.bf16.msra.mxu0 0
    %164 = vmatprep.subr.bf16.mxu0 0
    %165 = vmatpush2.bf16.msra.mxu0 0
    %166 = vmatprep.subr.bf16.mxu0 0
    %167 = vmatpush2.bf16.msra.mxu0 0
    %168 = vmatprep.subr.bf16.mxu0 0
    %169 = vmatpush2.bf16.msra.mxu0 0
    %170 = vmatprep.subr.bf16.mxu0 0
    %171 = vmatpush2.bf16.msra.mxu0 0
    %172 = vmatprep.subr.bf16.mxu0 0
    %173 = vmatpush2.bf16.msra.mxu0 0
    %174 = vmatprep.subr.bf16.mxu0 0
    %175 = vmatpush2.bf16.msra.mxu0 0
    %176 = vmatprep.mubr.bf16.mxu0 0
    %177 = vmatmul.mubr.bf16.gmra.mxu0 %v142
    %v178 = vpop.f32.mrf.mxu0
    %v179 = vadd.f32 %v83, %v178
    %v180 = vpop.f32.mrf.mxu0
    %v181 = vadd.f32 %v87, %v180
    %v182 = vpop.f32.mrf.mxu0
    %v183 = vpop.f32.mrf.mxu0
    %184 = vdwg.mxu0
    %185 = vmatprep.subr.bf16.mxu0 0
    %186 = vmatpush1.bf16.msra.mxu0 0
    %187 = vmatprep.subr.bf16.mxu0 0
    %188 = vmatpush1.bf16.msra.mxu0 0
    %189 = vmatprep.subr.bf16.mxu0 0
    %190 = vmatpush1.bf16.msra.mxu0 0
    %191 = vmatprep.subr.bf16.mxu0 0
    %192 = vmatpush1.bf16.msra.mxu0 0
    %193 = vmatprep.subr.bf16.mxu0 0
    %194 = vmatpush1.bf16.msra.mxu0 0
    %195 = vmatprep.subr.bf16.mxu0 0
    %196 = vmatpush1.bf16.msra.mxu0 0
    %197 = vmatprep.subr.bf16.mxu0 %v131
    %198 = vmatpush1.bf16.msra.mxu0 %v130
    %199 = vmatprep.subr.bf16.mxu0 %v127
    %200 = vmatpush1.bf16.msra.mxu0 %v126
    %201 = vmatprep.subr.bf16.mxu0 0
    %202 = vmatpush2.bf16.msra.mxu0 0
    %203 = vmatprep.subr.bf16.mxu0 0
    %204 = vmatpush2.bf16.msra.mxu0 0
    %205 = vmatprep.subr.bf16.mxu0 0
    %206 = vmatpush2.bf16.msra.mxu0 0
    %207 = vmatprep.subr.bf16.mxu0 0
    %208 = vmatpush2.bf16.msra.mxu0 0
    %209 = vmatprep.subr.bf16.mxu0 0
    %210 = vmatpush2.bf16.msra.mxu0 0
    %211 = vmatprep.subr.bf16.mxu0 0
    %212 = vmatpush2.bf16.msra.mxu0 0
    %213 = vmatprep.subr.bf16.mxu0 0
    %214 = vmatpush2.bf16.msra.mxu0 0
    %215 = vmatprep.subr.bf16.mxu0 0
    %216 = vmatpush2.bf16.msra.mxu0 0
    %217 = vmatprep.mubr.bf16.mxu0 0
    %218 = vmatmul.mubr.bf16.gmra.mxu0 %v142
    %v219 = vpop.f32.mrf.mxu0
    %v220 = vadd.f32 %v91, %v219
    %v221 = vpop.f32.mrf.mxu0
    %v222 = vadd.f32 %v95, %v221
    %v223 = vpop.f32.mrf.mxu0
    %v224 = vpop.f32.mrf.mxu0
    %225 = vdwg.mxu0
    %vm226 = vcmp.gt.f32.partialorder %v179, 0.0
    %vm227 = vcmp.gt.f32.partialorder %v181, 0.0
    %vm228 = vcmp.gt.f32.partialorder %v220, 0.0
    %vm229 = vcmp.gt.f32.partialorder %v222, 0.0
    %v230 = vmul.f32 %v179, 0.2
    %v231 = vmul.f32 %v181, 0.2
    %v232 = vmul.f32 %v220, 0.2
    %v233 = vmul.f32 %v222, 0.2
    %v234 = vsel %vm226, %v179, %v230
    %v235 = vsel %vm227, %v181, %v231
    %v236 = vsel %vm228, %v220, %v232
    %v237 = vsel %vm229, %v222, %v233
    %v238 = vpack.c.bf16 %v234, %v234
    %v239 = vpack.c.bf16 %v235, %v235
    %v240 = vpack.c.bf16 %v236, %v236
    %v241 = vpack.c.bf16 %v237, %v237
    %v242 = vld [vmem:[#allocation8] sm:$0xff]
    %v243 = vld [vmem:[#allocation8 + $0x8] sm:$0xff]
    %v244 = vld [vmem:[#allocation8 + $0x10] sm:$0xff]
    %v245 = vld [vmem:[#allocation8 + $0x18] sm:$0xff]
    %v246 = vld [vmem:[#allocation8 + $0x20] sm:$0xff]
    %v247 = vld [vmem:[#allocation8 + $0x28] sm:$0xff]
    %v248 = vld [vmem:[#allocation8 + $0x30] sm:$0xff]
    %v249 = vld [vmem:[#allocation8 + $0x38] sm:$0xff]
    %v250 = vld [vmem:[#allocation8 + $0x40] sm:$0xff]
    %v251 = vld [vmem:[#allocation8 + $0x48] sm:$0xff]
    %v252 = vld [vmem:[#allocation8 + $0x50] sm:$0xff]
    %v253 = vld [vmem:[#allocation8 + $0x58] sm:$0xff]
    %v254 = vld [vmem:[#allocation8 + $0x60] sm:$0xff]
    %v255 = vld [vmem:[#allocation8 + $0x68] sm:$0xff]
    %v256 = vld [vmem:[#allocation8 + $0x70] sm:$0xff]
    %v257 = vld [vmem:[#allocation8 + $0x78] sm:$0xff]
    %v258 = vld [vmem:[#allocation8 + $0x80] sm:$0xff]
    %v259 = vld [vmem:[#allocation8 + $0x88] sm:$0xff]
    %v260 = vld [vmem:[#allocation8 + $0x90] sm:$0xff]
    %v261 = vld [vmem:[#allocation8 + $0x98] sm:$0xff]
    %v262 = vld [vmem:[#allocation8 + $0xa0] sm:$0xff]
    %v263 = vld [vmem:[#allocation8 + $0xa8] sm:$0xff]
    %v264 = vld [vmem:[#allocation8 + $0xb0] sm:$0xff]
    %v265 = vld [vmem:[#allocation8 + $0xb8] sm:$0xff]
    %v266 = vld [vmem:[#allocation8 + $0xc0] sm:$0xff]
    %v267 = vld [vmem:[#allocation8 + $0xc8] sm:$0xff]
    %v268 = vld [vmem:[#allocation8 + $0xd0] sm:$0xff]
    %v269 = vld [vmem:[#allocation8 + $0xd8] sm:$0xff]
    %v270 = vld [vmem:[#allocation8 + $0xe0] sm:$0xff]
    %v271 = vld [vmem:[#allocation8 + $0xe8] sm:$0xff]
    %v272 = vld [vmem:[#allocation8 + $0xf0] sm:$0xff]
    %v273 = vld [vmem:[#allocation8 + $0xf8] sm:$0xff]
    %v274 = vld [vmem:[#allocation8 + $0x100] sm:$0xff]
    %v275 = vld [vmem:[#allocation8 + $0x108] sm:$0xff]
    %v276 = vld [vmem:[#allocation8 + $0x110] sm:$0xff]
    %v277 = vld [vmem:[#allocation8 + $0x118] sm:$0xff]
    %v278 = vld [vmem:[#allocation8 + $0x120] sm:$0xff]
    %v279 = vld [vmem:[#allocation8 + $0x128] sm:$0xff]
    %v280 = vld [vmem:[#allocation8 + $0x130] sm:$0xff]
    %v281 = vld [vmem:[#allocation8 + $0x138] sm:$0xff]
    %v282 = vld [vmem:[#allocation8 + $0x140] sm:$0xff]
    %v283 = vld [vmem:[#allocation8 + $0x148] sm:$0xff]
    %v284 = vld [vmem:[#allocation8 + $0x150] sm:$0xff]
    %v285 = vld [vmem:[#allocation8 + $0x158] sm:$0xff]
    %v286 = vld [vmem:[#allocation8 + $0x160] sm:$0xff]
    %v287 = vld [vmem:[#allocation8 + $0x168] sm:$0xff]
    %v288 = vld [vmem:[#allocation8 + $0x170] sm:$0xff]
    %v289 = vld [vmem:[#allocation8 + $0x178] sm:$0xff]
    %v290 = vld [vmem:[#allocation8 + $0x180] sm:$0xff]
    %v291 = vld [vmem:[#allocation8 + $0x188] sm:$0xff]
    %v292 = vld [vmem:[#allocation8 + $0x190] sm:$0xff]
    %v293 = vld [vmem:[#allocation8 + $0x198] sm:$0xff]
    %v294 = vld [vmem:[#allocation8 + $0x1a0] sm:$0xff]
    %v295 = vld [vmem:[#allocation8 + $0x1a8] sm:$0xff]
    %v296 = vld [vmem:[#allocation8 + $0x1b0] sm:$0xff]
    %v297 = vld [vmem:[#allocation8 + $0x1b8] sm:$0xff]
    %v298 = vld [vmem:[#allocation8 + $0x1c0] sm:$0xff]
    %v299 = vld [vmem:[#allocation8 + $0x1c8] sm:$0xff]
    %v300 = vld [vmem:[#allocation8 + $0x1d0] sm:$0xff]
    %v301 = vld [vmem:[#allocation8 + $0x1d8] sm:$0xff]
    %v302 = vld [vmem:[#allocation8 + $0x1e0] sm:$0xff]
    %v303 = vld [vmem:[#allocation8 + $0x1e8] sm:$0xff]
    %v304 = vld [vmem:[#allocation8 + $0x1f0] sm:$0xff]
    %v305 = vld [vmem:[#allocation8 + $0x1f8] sm:$0xff]
    %v306 = vld [vmem:[%s4] sm:$0x3]
    %v308 = vlaneseq
    %v309 = vshrl.u32 %v308, 7
    %v310 = vsub.s32 0, %v309
    %v311 = vrot.slane %v306, %v310
    %v312 = vlaneseq
    %v313 = vshrl.u32 %v312, 7
    %v314 = vsub.s32 1, %v313
    %v315 = vrot.slane %v306, %v314
    %v382 = vunpack.c.l.b16 %v242
    %v383 = vunpack.c.h.b16 %v242
    %v384 = vunpack.c.l.b16 %v243
    %v385 = vunpack.c.h.b16 %v243
    %v386 = vunpack.c.l.b16 %v244
    %v387 = vunpack.c.h.b16 %v244
    %v388 = vunpack.c.l.b16 %v245
    %v389 = vunpack.c.h.b16 %v245
    %v390 = vunpack.c.l.b16 %v246
    %v391 = vunpack.c.h.b16 %v246
    %v392 = vunpack.c.l.b16 %v247
    %v393 = vunpack.c.h.b16 %v247
    %v394 = vunpack.c.l.b16 %v248
    %v395 = vunpack.c.h.b16 %v248
    %v396 = vunpack.c.l.b16 %v249
    %v397 = vunpack.c.h.b16 %v249
    %v398 = vunpack.c.l.b16 %v250
    %v399 = vunpack.c.h.b16 %v250
    %v400 = vunpack.c.l.b16 %v251
    %v401 = vunpack.c.h.b16 %v251
    %v402 = vunpack.c.l.b16 %v252
    %v403 = vunpack.c.h.b16 %v252
    %v404 = vunpack.c.l.b16 %v253
    %v405 = vunpack.c.h.b16 %v253
    %v406 = vunpack.c.l.b16 %v254
    %v407 = vunpack.c.h.b16 %v254
    %v408 = vunpack.c.l.b16 %v255
    %v409 = vunpack.c.h.b16 %v255
    %v410 = vunpack.c.l.b16 %v256
    %v411 = vunpack.c.h.b16 %v256
    %v412 = vunpack.c.l.b16 %v257
    %v413 = vunpack.c.h.b16 %v257
    %v414 = vunpack.c.l.b16 %v258
    %v415 = vunpack.c.h.b16 %v258
    %v416 = vunpack.c.l.b16 %v259
    %v417 = vunpack.c.h.b16 %v259
    %v418 = vunpack.c.l.b16 %v260
    %v419 = vunpack.c.h.b16 %v260
    %v420 = vunpack.c.l.b16 %v261
    %v421 = vunpack.c.h.b16 %v261
    %v422 = vunpack.c.l.b16 %v262
    %v423 = vunpack.c.h.b16 %v262
    %v424 = vunpack.c.l.b16 %v263
    %v425 = vunpack.c.h.b16 %v263
    %v426 = vunpack.c.l.b16 %v264
    %v427 = vunpack.c.h.b16 %v264
    %v428 = vunpack.c.l.b16 %v265
    %v429 = vunpack.c.h.b16 %v265
    %v430 = vunpack.c.l.b16 %v266
    %v431 = vunpack.c.h.b16 %v266
    %v432 = vunpack.c.l.b16 %v267
    %v433 = vunpack.c.h.b16 %v267
    %v434 = vunpack.c.l.b16 %v268
    %v435 = vunpack.c.h.b16 %v268
    %v436 = vunpack.c.l.b16 %v269
    %v437 = vunpack.c.h.b16 %v269
    %v438 = vunpack.c.l.b16 %v270
    %v439 = vunpack.c.h.b16 %v270
    %v440 = vunpack.c.l.b16 %v271
    %v441 = vunpack.c.h.b16 %v271
    %v442 = vunpack.c.l.b16 %v272
    %v443 = vunpack.c.h.b16 %v272
    %v444 = vunpack.c.l.b16 %v273
    %v445 = vunpack.c.h.b16 %v273
    %v446 = vunpack.c.l.b16 %v274
    %v447 = vunpack.c.h.b16 %v274
    %v448 = vunpack.c.l.b16 %v275
    %v449 = vunpack.c.h.b16 %v275
    %v450 = vunpack.c.l.b16 %v276
    %v451 = vunpack.c.h.b16 %v276
    %v452 = vunpack.c.l.b16 %v277
    %v453 = vunpack.c.h.b16 %v277
    %v454 = vunpack.c.l.b16 %v278
    %v455 = vunpack.c.h.b16 %v278
    %v456 = vunpack.c.l.b16 %v279
    %v457 = vunpack.c.h.b16 %v279
    %v458 = vunpack.c.l.b16 %v280
    %v459 = vunpack.c.h.b16 %v280
    %v460 = vunpack.c.l.b16 %v281
    %v461 = vunpack.c.h.b16 %v281
    %v462 = vunpack.c.l.b16 %v282
    %v463 = vunpack.c.h.b16 %v282
    %v464 = vunpack.c.l.b16 %v283
    %v465 = vunpack.c.h.b16 %v283
    %v466 = vunpack.c.l.b16 %v284
    %v467 = vunpack.c.h.b16 %v284
    %v468 = vunpack.c.l.b16 %v285
    %v469 = vunpack.c.h.b16 %v285
    %v470 = vunpack.c.l.b16 %v286
    %v471 = vunpack.c.h.b16 %v286
    %v472 = vunpack.c.l.b16 %v287
    %v473 = vunpack.c.h.b16 %v287
    %v474 = vunpack.c.l.b16 %v288
    %v475 = vunpack.c.h.b16 %v288
    %v476 = vunpack.c.l.b16 %v289
    %v477 = vunpack.c.h.b16 %v289
    %v478 = vunpack.c.l.b16 %v290
    %v479 = vunpack.c.h.b16 %v290
    %v480 = vunpack.c.l.b16 %v291
    %v481 = vunpack.c.h.b16 %v291
    %v482 = vunpack.c.l.b16 %v292
    %v483 = vunpack.c.h.b16 %v292
    %v484 = vunpack.c.l.b16 %v293
    %v485 = vunpack.c.h.b16 %v293
    %v486 = vunpack.c.l.b16 %v294
    %v487 = vunpack.c.h.b16 %v294
    %v488 = vunpack.c.l.b16 %v295
    %v489 = vunpack.c.h.b16 %v295
    %v490 = vunpack.c.l.b16 %v296
    %v491 = vunpack.c.h.b16 %v296
    %v492 = vunpack.c.l.b16 %v297
    %v493 = vunpack.c.h.b16 %v297
    %v494 = vunpack.c.l.b16 %v298
    %v495 = vunpack.c.h.b16 %v298
    %v496 = vunpack.c.l.b16 %v299
    %v497 = vunpack.c.h.b16 %v299
    %v498 = vunpack.c.l.b16 %v300
    %v499 = vunpack.c.h.b16 %v300
    %v500 = vunpack.c.l.b16 %v301
    %v501 = vunpack.c.h.b16 %v301
    %v502 = vunpack.c.l.b16 %v302
    %v503 = vunpack.c.h.b16 %v302
    %v504 = vunpack.c.l.b16 %v303
    %v505 = vunpack.c.h.b16 %v303
    %v506 = vunpack.c.l.b16 %v304
    %v507 = vunpack.c.h.b16 %v304
    %v508 = vunpack.c.l.b16 %v305
    %v509 = vunpack.c.h.b16 %v305
    %v510 = vpack.c.b16 %v384, %v382
    %v511 = vpack.c.b16 %v385, %v383
    %v512 = vpack.c.b16 %v388, %v386
    %v513 = vpack.c.b16 %v389, %v387
    %v514 = vpack.c.b16 %v392, %v390
    %v515 = vpack.c.b16 %v393, %v391
    %v516 = vpack.c.b16 %v396, %v394
    %v517 = vpack.c.b16 %v397, %v395
    %v518 = vpack.c.b16 %v400, %v398
    %v519 = vpack.c.b16 %v401, %v399
    %v520 = vpack.c.b16 %v404, %v402
    %v521 = vpack.c.b16 %v405, %v403
    %v522 = vpack.c.b16 %v408, %v406
    %v523 = vpack.c.b16 %v409, %v407
    %v524 = vpack.c.b16 %v412, %v410
    %v525 = vpack.c.b16 %v413, %v411
    %v526 = vpack.c.b16 %v416, %v414
    %v527 = vpack.c.b16 %v417, %v415
    %v528 = vpack.c.b16 %v420, %v418
    %v529 = vpack.c.b16 %v421, %v419
    %v530 = vpack.c.b16 %v424, %v422
    %v531 = vpack.c.b16 %v425, %v423
    %v532 = vpack.c.b16 %v428, %v426
    %v533 = vpack.c.b16 %v429, %v427
    %v534 = vpack.c.b16 %v432, %v430
    %v535 = vpack.c.b16 %v433, %v431
    %v536 = vpack.c.b16 %v436, %v434
    %v537 = vpack.c.b16 %v437, %v435
    %v538 = vpack.c.b16 %v440, %v438
    %v539 = vpack.c.b16 %v441, %v439
    %v540 = vpack.c.b16 %v444, %v442
    %v541 = vpack.c.b16 %v445, %v443
    %v542 = vpack.c.b16 %v448, %v446
    %v543 = vpack.c.b16 %v449, %v447
    %v544 = vpack.c.b16 %v452, %v450
    %v545 = vpack.c.b16 %v453, %v451
    %v546 = vpack.c.b16 %v456, %v454
    %v547 = vpack.c.b16 %v457, %v455
    %v548 = vpack.c.b16 %v460, %v458
    %v549 = vpack.c.b16 %v461, %v459
    %v550 = vpack.c.b16 %v464, %v462
    %v551 = vpack.c.b16 %v465, %v463
    %v552 = vpack.c.b16 %v468, %v466
    %v553 = vpack.c.b16 %v469, %v467
    %v554 = vpack.c.b16 %v472, %v470
    %v555 = vpack.c.b16 %v473, %v471
    %v556 = vpack.c.b16 %v476, %v474
    %v557 = vpack.c.b16 %v477, %v475
    %v558 = vpack.c.b16 %v480, %v478
    %v559 = vpack.c.b16 %v481, %v479
    %v560 = vpack.c.b16 %v484, %v482
    %v561 = vpack.c.b16 %v485, %v483
    %v562 = vpack.c.b16 %v488, %v486
    %v563 = vpack.c.b16 %v489, %v487
    %v564 = vpack.c.b16 %v492, %v490
    %v565 = vpack.c.b16 %v493, %v491
    %v566 = vpack.c.b16 %v496, %v494
    %v567 = vpack.c.b16 %v497, %v495
    %v568 = vpack.c.b16 %v500, %v498
    %v569 = vpack.c.b16 %v501, %v499
    %v570 = vpack.c.b16 %v504, %v502
    %v571 = vpack.c.b16 %v505, %v503
    %v572 = vpack.c.b16 %v508, %v506
    %v573 = vpack.c.b16 %v509, %v507
    %638 = vmatprep.subr.bf16.mxu0 %v525
    %639 = vmatpush1.bf16.msra.mxu0 %v524
    %640 = vmatprep.subr.bf16.mxu0 %v523
    %641 = vmatpush1.bf16.msra.mxu0 %v522
    %642 = vmatprep.subr.bf16.mxu0 %v521
    %643 = vmatpush1.bf16.msra.mxu0 %v520
    %644 = vmatprep.subr.bf16.mxu0 %v519
    %645 = vmatpush1.bf16.msra.mxu0 %v518
    %646 = vmatprep.subr.bf16.mxu0 %v517
    %647 = vmatpush1.bf16.msra.mxu0 %v516
    %648 = vmatprep.subr.bf16.mxu0 %v515
    %649 = vmatpush1.bf16.msra.mxu0 %v514
    %650 = vmatprep.subr.bf16.mxu0 %v513
    %651 = vmatpush1.bf16.msra.mxu0 %v512
    %652 = vmatprep.subr.bf16.mxu0 %v511
    %653 = vmatpush1.bf16.msra.mxu0 %v510
    %654 = vmatprep.subr.bf16.mxu0 %v541
    %655 = vmatpush2.bf16.msra.mxu0 %v540
    %656 = vmatprep.subr.bf16.mxu0 %v539
    %657 = vmatpush2.bf16.msra.mxu0 %v538
    %658 = vmatprep.subr.bf16.mxu0 %v537
    %659 = vmatpush2.bf16.msra.mxu0 %v536
    %660 = vmatprep.subr.bf16.mxu0 %v535
    %661 = vmatpush2.bf16.msra.mxu0 %v534
    %662 = vmatprep.subr.bf16.mxu0 %v533
    %663 = vmatpush2.bf16.msra.mxu0 %v532
    %664 = vmatprep.subr.bf16.mxu0 %v531
    %665 = vmatpush2.bf16.msra.mxu0 %v530
    %666 = vmatprep.subr.bf16.mxu0 %v529
    %667 = vmatpush2.bf16.msra.mxu0 %v528
    %668 = vmatprep.subr.bf16.mxu0 %v527
    %669 = vmatpush2.bf16.msra.mxu0 %v526
    %670 = vmatprep.mubr.bf16.mxu0 %v239
    %671 = vmatmul.mubr.bf16.gmra.mxu0 %v238
    %v672 = vpop.f32.mrf.mxu0
    %v673 = vadd.f32 %v311, %v672
    %v674 = vpop.f32.mrf.mxu0
    %v675 = vadd.f32 %v315, %v674
    %v676 = vpop.f32.mrf.mxu0
    %v677 = vpop.f32.mrf.mxu0
    %678 = vdwg.mxu0
    %679 = vmatprep.subr.bf16.mxu0 %v557
    %680 = vmatpush1.bf16.msra.mxu0 %v556
    %681 = vmatprep.subr.bf16.mxu0 %v555
    %682 = vmatpush1.bf16.msra.mxu0 %v554
    %683 = vmatprep.subr.bf16.mxu0 %v553
    %684 = vmatpush1.bf16.msra.mxu0 %v552
    %685 = vmatprep.subr.bf16.mxu0 %v551
    %686 = vmatpush1.bf16.msra.mxu0 %v550
    %687 = vmatprep.subr.bf16.mxu0 %v549
    %688 = vmatpush1.bf16.msra.mxu0 %v548
    %689 = vmatprep.subr.bf16.mxu0 %v547
    %690 = vmatpush1.bf16.msra.mxu0 %v546
    %691 = vmatprep.subr.bf16.mxu0 %v545
    %692 = vmatpush1.bf16.msra.mxu0 %v544
    %693 = vmatprep.subr.bf16.mxu0 %v543
    %694 = vmatpush1.bf16.msra.mxu0 %v542
    %695 = vmatprep.subr.bf16.mxu0 %v573
    %696 = vmatpush2.bf16.msra.mxu0 %v572
    %697 = vmatprep.subr.bf16.mxu0 %v571
    %698 = vmatpush2.bf16.msra.mxu0 %v570
    %699 = vmatprep.subr.bf16.mxu0 %v569
    %700 = vmatpush2.bf16.msra.mxu0 %v568
    %701 = vmatprep.subr.bf16.mxu0 %v567
    %702 = vmatpush2.bf16.msra.mxu0 %v566
    %703 = vmatprep.subr.bf16.mxu0 %v565
    %704 = vmatpush2.bf16.msra.mxu0 %v564
    %705 = vmatprep.subr.bf16.mxu0 %v563
    %706 = vmatpush2.bf16.msra.mxu0 %v562
    %707 = vmatprep.subr.bf16.mxu0 %v561
    %708 = vmatpush2.bf16.msra.mxu0 %v560
    %709 = vmatprep.subr.bf16.mxu0 %v559
    %710 = vmatpush2.bf16.msra.mxu0 %v558
    %711 = vmatprep.mubr.bf16.mxu0 %v241
    %712 = vmatmul.mubr.bf16.gmra.mxu0 %v240
    %v713 = vpop.f32.mrf.mxu0
    %v714 = vadd.f32 %v673, %v713
    %v715 = vpop.f32.mrf.mxu0
    %v716 = vadd.f32 %v675, %v715
    %v717 = vpop.f32.mrf.mxu0
    %v718 = vpop.f32.mrf.mxu0
    %719 = vdwg.mxu0
    %vm720 = vcmp.gt.f32.partialorder %v714, 0.0
    %vm721 = vcmp.gt.f32.partialorder %v716, 0.0
    %v722 = vmul.f32 %v714, 0.2
    %v723 = vmul.f32 %v716, 0.2
    %v724 = vsel %vm720, %v714, %v722
    %v725 = vsel %vm721, %v716, %v723
    %v726 = vld [vmem:[%s5] sm:$0x3]
    %v728 = vlaneseq
    %v729 = vshrl.u32 %v728, 7
    %v730 = vsub.s32 0, %v729
    %v731 = vrot.slane %v726, %v730
    %v732 = vlaneseq
    %v733 = vshrl.u32 %v732, 7
    %v734 = vsub.s32 1, %v733
    %v735 = vrot.slane %v726, %v734
    %v738 = vmul.f32 %v724, %v731
    %v739 = vmul.f32 %v725, %v735
    %v740 = vadd.f32 %v738, %v739
    %741 = vadd.xlane.f32.xlu0 %v740
    %v742 = vpop.xlane.xlu0 %741
    %s743 = sld [smem:[#allocation2]]
    %v744 = vstv %s743
    %v745 = vadd.f32 %v742, %v744
    %v746 = vxor.u32 %v745, 2147483648
    %v747 = vmul.f32 %v746, 1.442695
    %v748 = vpow.pop %v747
    %v749 = vadd.f32 %v748, 1.0
    %v750 = vrcp.pop %v749
    %v751 = vmul.f32 1.0, %v750
    %752 = vxpose.xlu0.b32.start [1/16] %v751, 128
    %753 = vxpose.xlu0.b32.cont [2/16] 0.0, 128
    %754 = vxpose.xlu0.b32.cont [3/16] 0.0, 128
    %755 = vxpose.xlu0.b32.cont [4/16] 0.0, 128
    %756 = vxpose.xlu0.b32.cont [5/16] 0.0, 128
    %757 = vxpose.xlu0.b32.cont [6/16] 0.0, 128
    %758 = vxpose.xlu0.b32.cont [7/16] 0.0, 128
    %759 = vxpose.xlu0.b32.cont [8/16] 0.0, 128
    %760 = vxpose.xlu0.b32.cont [9/16] 0.0, 128
    %761 = vxpose.xlu0.b32.cont [10/16] 0.0, 128
    %762 = vxpose.xlu0.b32.cont [11/16] 0.0, 128
    %763 = vxpose.xlu0.b32.cont [12/16] 0.0, 128
    %764 = vxpose.xlu0.b32.cont [13/16] 0.0, 128
    %765 = vxpose.xlu0.b32.cont [14/16] 0.0, 128
    %766 = vxpose.xlu0.b32.cont [15/16] 0.0, 128
    %767 = vxpose.xlu0.b32.end [16/16] 0.0, 128
    %v768 = vpop.trf.xlu0
    %v769 = vpop.trf.xlu0
    %v770 = vpop.trf.xlu0
    %v771 = vpop.trf.xlu0
    %v772 = vpop.trf.xlu0
    %v773 = vpop.trf.xlu0
    %v774 = vpop.trf.xlu0
    %v775 = vpop.trf.xlu0
    %v776 = vpop.trf.xlu0
    %v777 = vpop.trf.xlu0
    %v778 = vpop.trf.xlu0
    %v779 = vpop.trf.xlu0
    %v780 = vpop.trf.xlu0
    %v781 = vpop.trf.xlu0
    %v782 = vpop.trf.xlu0
    %v783 = vpop.trf.xlu0
    %vm784 = vcmask 57344
    %785 = vst.msk [vmem:[#allocation9] sm:$0x1] %vm784, %v768
    // Predicated region
    $region42: #{tpu_custom_call.1} parent=1 // pred_check
      _
    $region43: #{tpu_custom_call.1} parent=1 // pred_check_branch
      %787 = sbr.rel (0) target = $region45
    $region44: #{tpu_custom_call.1} parent=1 // pred_region
      %s789 = ssub.s32 16, 16
      %790 = vsyncadd [#allocation5], %s789
      %s792 = sshll.u32 [#allocation9], 4
      %s793 = int_to_ptr.vmem [resolvable:$true] %s792
      %795 = dma.vmem_to_hbm [thread:$0]  %s793, 16, %s7, [#allocation5]
    $region45: #{tpu_custom_call.1} parent=1 // pred_fallthru
      _
    // Predicated region
    $region46: #{tpu_custom_call.1} parent=1 // pred_check
      _
    $region47: #{tpu_custom_call.1} parent=1 // pred_check_branch
      %797 = sbr.rel (0) target = $region49
    $region48: #{tpu_custom_call.1} parent=1 // pred_region
      %798 = dma.done [#allocation5], 16
    $region49: #{tpu_custom_call.1} parent=1 // pred_fallthru
      _
    %799 = vsyncpa [#allocation4], 1
    %800 = vsyncpa [#allocation7], 1
    %801 = vsyncpa [#allocation5], 1

</llo_original>
